<compile_context>
chip_gen: v5e
topology: v5e:2x2
jax: 0.10.0
libtpu: 0.0.40
codegen_flags: <defaults>
</compile_context>

<pallas_src>
import functools

import jax
import jax.numpy as jnp
from jax.experimental import pallas as pl
from jax.experimental.pallas import tpu as pltpu


def _round_up(x, m):
    return ((x + m - 1) // m) * m


# ----------------------------------------------------------------------------
# Pallas kernel 1: tiled GEMM + bias (+ optional ReLU) -- every conv & the heads
# ----------------------------------------------------------------------------
def matmul_bias_kernel(x_ref, w_ref, b_ref, o_ref, *, relu):
    acc = jnp.dot(x_ref[...], w_ref[...], preferred_element_type=jnp.float32)
    acc = acc + b_ref[...]
    if relu:
        acc = jnp.maximum(acc, 0.0)
    o_ref[...] = acc


def pallas_linear(x, w, b, relu=False, tm=256):
    """x: (M, K), w: (K, N), b: (N,) -> (M, N) f32.

    Operands are cast to bf16 (MXU-native) with f32 accumulation. N is padded to a
    lane-dense multiple of 128 (unmasked stores), K to a multiple of 16 (bf16 sublane
    packing), M to the tile size; padding is sliced off outside the kernel.
    """
    M, K = x.shape
    N = w.shape[1]
    Np = _round_up(N, 128)
    Kp = _round_up(K, 16)
    tm_eff = min(tm, _round_up(M, 8))
    Mp = _round_up(M, tm_eff)

    xp = jnp.pad(x, ((0, Mp - M), (0, Kp - K))).astype(jnp.bfloat16)
    wp = jnp.pad(w, ((0, Kp - K), (0, Np - N))).astype(jnp.bfloat16)
    bp = jnp.pad(b, (0, Np - N)).reshape(1, Np).astype(jnp.float32)

    kernel = functools.partial(matmul_bias_kernel, relu=relu)
    out = pl.pallas_call(
        kernel,
        out_shape=jax.ShapeDtypeStruct((Mp, Np), jnp.float32),
        grid=(Mp // tm_eff,),
        in_specs=[
            pl.BlockSpec((tm_eff, Kp), lambda i: (i, 0)),
            pl.BlockSpec((Kp, Np), lambda i: (0, 0)),
            pl.BlockSpec((1, Np), lambda i: (0, 0)),
        ],
        out_specs=pl.BlockSpec((tm_eff, Np), lambda i: (i, 0)),
        compiler_params=pltpu.CompilerParams(
            dimension_semantics=("parallel",),
            vmem_limit_bytes=32 * 1024 * 1024),
    )(xp, wp, bp)
    return out[:M, :N]


# ----------------------------------------------------------------------------
# Pallas kernel 2: detection loss (sigmoid focal + masked Huber), tiled reduction
# ----------------------------------------------------------------------------
def det_loss_kernel(cl_ref, ct_ref, cv_ref, bp_ref, bt_ref, bv_ref,
                    cls_out_ref, box_out_ref, *, alpha, gamma, delta):
    @pl.when(pl.program_id(0) == 0)
    def _():
        cls_out_ref[...] = jnp.zeros_like(cls_out_ref)
        box_out_ref[...] = jnp.zeros_like(box_out_ref)

    # sigmoid focal loss (alpha / gamma as in effdet DetectionLoss)
    logits = cl_ref[...]
    t = ct_ref[...]
    valid = cv_ref[...]
    p = jax.nn.sigmoid(logits)
    ce = jnp.maximum(logits, 0.0) - logits * t + jnp.log1p(jnp.exp(-jnp.abs(logits)))
    p_t = t * p + (1.0 - t) * (1.0 - p)
    alpha_t = t * alpha + (1.0 - t) * (1.0 - alpha)
    one_m = 1.0 - p_t
    if gamma == 1.5:
        modulator = one_m * jnp.sqrt(one_m)     # exact for gamma=1.5, avoids pow on EUP
    else:
        modulator = jnp.power(one_m, gamma)
    focal = alpha_t * modulator * ce * valid
    cls_out_ref[...] += jnp.sum(focal, keepdims=True)

    # Huber box loss, masked by (box_target != 0) exactly like effdet _box_loss
    boxp = bp_ref[...]
    boxt = bt_ref[...]
    bvalid = bv_ref[...]
    err = boxp - boxt
    abs_err = jnp.abs(err)
    huber = jnp.where(abs_err <= delta,
                      0.5 * err * err,
                      delta * abs_err - 0.5 * delta * delta)
    mask = (boxt != 0.0).astype(jnp.float32)
    huber = huber * mask * bvalid
    box_out_ref[...] += jnp.sum(huber, keepdims=True)


def pallas_detection_loss_sums(cls_logits, cls_tgt, box_pred, box_tgt,
                               alpha, gamma, delta, max_tile_rows=512):
    """Flattens everything into lane-dense (rows, 128) blocks and reduces on-chip."""
    cl = cls_logits.reshape(-1).astype(jnp.float32)
    ct = cls_tgt.reshape(-1).astype(jnp.float32)
    bp = box_pred.reshape(-1).astype(jnp.float32)
    bt = box_tgt.reshape(-1).astype(jnp.float32)
    cv = jnp.ones_like(cl)          # valid masks: zero-padded below -> padding masked out
    bv = jnp.ones_like(bp)

    L = max(cl.shape[0], bp.shape[0])
    rows = pl.cdiv(L, 128)
    tile_rows = min(max_tile_rows, max(8, (rows // 16) * 8))
    rows_p = _round_up(rows, tile_rows)
    Lp = rows_p * 128

    def prep(a):
        return jnp.pad(a, (0, Lp - a.shape[0])).reshape(rows_p, 128)

    args = [prep(a) for a in (cl, ct, cv, bp, bt, bv)]
    kernel = functools.partial(det_loss_kernel, alpha=alpha, gamma=gamma, delta=delta)
    in_spec = pl.BlockSpec((tile_rows, 128), lambda i: (i, 0))
    out_spec = pl.BlockSpec((1, 1), lambda i: (0, 0))
    cls_sum, box_sum = pl.pallas_call(
        kernel,
        out_shape=(jax.ShapeDtypeStruct((1, 1), jnp.float32),
                   jax.ShapeDtypeStruct((1, 1), jnp.float32)),
        grid=(rows_p // tile_rows,),
        in_specs=[in_spec] * 6,
        out_specs=(out_spec, out_spec),
        compiler_params=pltpu.CompilerParams(
            dimension_semantics=("arbitrary",),
            vmem_limit_bytes=32 * 1024 * 1024),
    )(*args)
    return cls_sum[0, 0], box_sum[0, 0]


# ----------------------------------------------------------------------------
# Glue: im2col conv, anchors, labeling, encoding
# ----------------------------------------------------------------------------
def im2col(x, ksize, stride, padding):
    """x: (B, H, W, C) NHWC -> (B, Ho, Wo, k*k*C)."""
    B, H, W, C = x.shape
    xp = jnp.pad(x, ((0, 0), (padding, padding), (padding, padding), (0, 0)))
    Ho = (H + 2 * padding - ksize) // stride + 1
    Wo = (W + 2 * padding - ksize) // stride + 1
    cols = []
    for i in range(ksize):
        for j in range(ksize):
            patch = xp[:, i:i + stride * (Ho - 1) + 1:stride,
                          j:j + stride * (Wo - 1) + 1:stride, :]
            cols.append(patch)
    return jnp.concatenate(cols, axis=-1), Ho, Wo


def conv2d(x, w, b, ksize, stride, padding, relu):
    B = x.shape[0]
    cols, Ho, Wo = im2col(x, ksize, stride, padding)
    flat = cols.reshape(B * Ho * Wo, cols.shape[-1])
    out = pallas_linear(flat, w, b, relu=relu)
    return out.reshape(B, Ho, Wo, -1)


def generate_anchors(image_size, level_shapes, scales):
    all_a = []
    for (H, W) in level_shapes:
        stride = float(image_size) / float(H)
        ys = (jnp.arange(H, dtype=jnp.float32) + 0.5) * stride
        xs = (jnp.arange(W, dtype=jnp.float32) + 0.5) * stride
        cy, cx = jnp.meshgrid(ys, xs, indexing='ij')
        per_scale = []
        for s in scales:
            half = 0.5 * stride * 2.0 * s
            per_scale.append(jnp.stack([cy - half, cx - half, cy + half, cx + half], axis=-1))
        a = jnp.stack(per_scale, axis=2)          # (H, W, A, 4) yxyx
        all_a.append(a.reshape(-1, 4))
    return jnp.concatenate(all_a, axis=0)          # (N_anc, 4)


def box_iou(a, b):
    area_a = (a[:, 2] - a[:, 0]) * (a[:, 3] - a[:, 1])
    area_b = (b[:, 2] - b[:, 0]) * (b[:, 3] - b[:, 1])
    tl = jnp.maximum(a[:, None, :2], b[None, :, :2])
    br = jnp.minimum(a[:, None, 2:], b[None, :, 2:])
    wh = jnp.maximum(br - tl, 0.0)
    inter = wh[..., 0] * wh[..., 1]
    union = area_a[:, None] + area_b[None, :] - inter
    return inter / jnp.maximum(union, 1e-8)


def encode_boxes(gt, anchors):
    acy = 0.5 * (anchors[:, 0] + anchors[:, 2])
    acx = 0.5 * (anchors[:, 1] + anchors[:, 3])
    ah = anchors[:, 2] - anchors[:, 0]
    aw = anchors[:, 3] - anchors[:, 1]
    gcy = 0.5 * (gt[:, 0] + gt[:, 2])
    gcx = 0.5 * (gt[:, 1] + gt[:, 3])
    gh = gt[:, 2] - gt[:, 0]
    gw = gt[:, 3] - gt[:, 1]
    ty = (gcy - acy) / ah
    tx = (gcx - acx) / aw
    th = jnp.log(jnp.maximum(gh, 1e-8) / ah)
    tw = jnp.log(jnp.maximum(gw, 1e-8) / aw)
    return jnp.stack([ty, tx, th, tw], axis=-1)


def label_anchors(anchors, gt_boxes, gt_cls, num_classes, match_threshold):
    iou = box_iou(anchors, gt_boxes)                       # (N_anc, Ngt)
    best_iou = jnp.max(iou, axis=1)
    best_gt = jnp.argmax(iou, axis=1)
    pos = (best_iou >= match_threshold).astype(jnp.float32)
    matched_cls = (gt_cls[best_gt] - 1.0).astype(jnp.int32)
    cls_onehot = jax.nn.one_hot(matched_cls, num_classes, dtype=jnp.float32) * pos[:, None]
    matched_box = gt_boxes[best_gt]
    box_tgt = encode_boxes(matched_box, anchors) * pos[:, None]
    return cls_onehot, box_tgt, jnp.sum(pos)


# ----------------------------------------------------------------------------
# Model: small feature pyramid + shared class/box heads (all GEMMs in Pallas)
# ----------------------------------------------------------------------------
def init_params(key, cfg):
    C, Cin = cfg['channels'], cfg['in_channels']
    A, NC = cfg['num_anchors'], cfg['num_classes']
    ks = jax.random.split(key, 5)

    def dense(k, fan_in, fan_out):
        return (jax.random.normal(k, (fan_in, fan_out), jnp.float32)
                / jnp.sqrt(jnp.float32(fan_in)))

    return {
        'stem_w': dense(ks[0], 9 * Cin, C), 'stem_b': jnp.zeros((C,), jnp.float32),
        'down1_w': dense(ks[1], 9 * C, C), 'down1_b': jnp.zeros((C,), jnp.float32),
        'down2_w': dense(ks[2], 9 * C, C), 'down2_b': jnp.zeros((C,), jnp.float32),
        'cls_w': dense(ks[3], C, A * NC),
        'cls_b': jnp.full((A * NC,), -4.595, jnp.float32),   # focal-loss prior bias
        'box_w': dense(ks[4], C, A * 4), 'box_b': jnp.zeros((A * 4,), jnp.float32),
    }


def effdet_forward(params, x, cfg):
    A, NC = cfg['num_anchors'], cfg['num_classes']
    f0 = conv2d(x, params['stem_w'], params['stem_b'], 3, 2, 1, relu=True)
    f1 = conv2d(f0, params['down1_w'], params['down1_b'], 3, 2, 1, relu=True)
    f2 = conv2d(f1, params['down2_w'], params['down2_b'], 3, 2, 1, relu=True)
    feats = [f0, f1, f2]
    level_shapes = [f.shape[1:3] for f in feats]
    B = x.shape[0]
    C = feats[0].shape[-1]

    # Fused heads: concat pyramid levels along M and cls/box weights along N so the
    # shared class + box heads run as ONE lane-dense Pallas GEMM call.
    flat_all = jnp.concatenate([f.reshape(-1, C) for f in feats], axis=0)
    w_head = jnp.concatenate([params['cls_w'], params['box_w']], axis=1)   # (C, A*NC + A*4)
    b_head = jnp.concatenate([params['cls_b'], params['box_b']], axis=0)
    head_out = pallas_linear(flat_all, w_head, b_head, relu=False)
    n_cls = A * NC
    cls_flat = head_out[:, :n_cls]
    box_flat = head_out[:, n_cls:n_cls + A * 4]

    cls_outs, box_outs = [], []
    off = 0
    for (H, W) in level_shapes:
        n = B * H * W
        cls_outs.append(cls_flat[off:off + n].reshape(B, H * W * A, NC))
        box_outs.append(box_flat[off:off + n].reshape(B, H * W * A, 4))
        off += n
    return jnp.concatenate(cls_outs, axis=1), jnp.concatenate(box_outs, axis=1), level_shapes


# ----------------------------------------------------------------------------
# Net.forward equivalent
# ----------------------------------------------------------------------------
def net_forward(params, batch, cfg):
    images = batch['input']                                   # (B, Cin, H, W) NCHW
    _label = jnp.argmax(batch['target'], axis=1)              # as in Net.forward (unused downstream)
    boxes = batch['boxes']                                     # (B, Ngt, 5) [y1,x1,y2,x2,cls0]
    gt_bbox = boxes[..., :4].astype(jnp.float32)
    gt_cls = boxes[..., 4].astype(jnp.float32) + 1.0

    # layout: NCHW -> NHWC for the kernels
    x = jnp.transpose(images, (0, 2, 3, 1)).astype(jnp.float32)

    class_out, box_out, level_shapes = effdet_forward(params, x, cfg)

    anchors = generate_anchors(cfg['image_size'], level_shapes, cfg['anchor_scales'])
    cls_tgt, box_tgt, num_pos = jax.vmap(
        lambda gb, gc: label_anchors(anchors, gb, gc, cfg['num_classes'],
                                     cfg['match_threshold'])
    )(gt_bbox, gt_cls)

    cls_sum, box_sum = pallas_detection_loss_sums(
        class_out, cls_tgt, box_out, box_tgt,
        alpha=cfg['alpha'], gamma=cfg['gamma'], delta=cfg['delta'])

    num_positives_sum = jnp.sum(num_pos) + 1.0
    cls_loss = cls_sum / num_positives_sum
    box_loss = box_sum / (num_positives_sum * 4.0)
    loss = cls_loss + cfg['box_loss_weight'] * box_loss

    return {
        'loss': loss,
        'class_loss': cls_loss,
        'box_loss': box_loss,
        'box_target': gt_bbox,
        'study_idx': batch['study_idx'],
    }


# ----------------------------------------------------------------------------
if __name__ == "__main__":
    key = jax.random.PRNGKey(0)
    B, Cin, H, W = 2, 4, 16, 16
    cfg = dict(
        in_channels=Cin, image_size=H, channels=32,
        num_levels=3, num_anchors=3, num_classes=1,
        anchor_scales=(1.0, 1.25, 1.5), match_threshold=0.5,
        alpha=0.25, gamma=1.5, delta=0.1, box_loss_weight=50.0,
    )

    kp, ki, kt = jax.random.split(key, 3)
    params = init_params(kp, cfg)

    images = jax.random.normal(ki, (B, Cin, H, W), jnp.float32)
    target = jax.random.normal(kt, (B, 4), jnp.float32)          # one-hot-ish study label logits
    boxes = jnp.array(
        [[[2.0, 2.0, 10.0, 10.0, 0.0],
          [6.0, 6.0, 14.0, 14.0, 0.0]],
         [[1.0, 3.0, 9.0, 11.0, 0.0],
          [4.0, 4.0, 12.0, 12.0, 0.0]]], jnp.float32)             # (B, Ngt, 5)
    batch = {
        'input': images,
        'target': target,
        'boxes': boxes,
        'study_idx': jnp.arange(B, dtype=jnp.int32),
    }

    out = net_forward(params, batch, cfg)
    jax.block_until_ready(out)
    assert jnp.isfinite(out['loss']).item()
    print("KERNEL_OK")
</pallas_src>

<mosaic_0001>
module attributes {stable_mosaic.version = 11 : i64} {
  func.func @matmul_bias_kernel(%arg0: i32, %arg1: memref<128x48xbf16, #tpu.memory_space<vmem>>, %arg2: memref<48x128xbf16, #tpu.memory_space<vmem>>, %arg3: memref<1x128xf32, #tpu.memory_space<vmem>>, %arg4: memref<128x128xf32, #tpu.memory_space<vmem>>) attributes {dimension_semantics = [#tpu.dimension_semantics<parallel>], iteration_bounds = array<i64: 1>, scalar_prefetch = 0 : i64, scratch_operands = 0 : i64, tpu.core_type = #tpu.core_type<tc>, window_params = [{transform_indices = @transform_0, window_bounds = array<i64: 128, 48>}, {pipeline_mode = #tpu.pipeline_mode<synchronous>, transform_indices = @transform_1, window_bounds = array<i64: 48, 128>}, {pipeline_mode = #tpu.pipeline_mode<synchronous>, transform_indices = @transform_2, window_bounds = array<i64: 1, 128>}, {transform_indices = @transform_3, window_bounds = array<i64: 128, 128>}]} {
    %c0 = arith.constant 0 : index
    %c0_0 = arith.constant 0 : index
    %0 = vector.load %arg1[%c0, %c0_0] : memref<128x48xbf16, #tpu.memory_space<vmem>>, vector<128x48xbf16>
    %c0_1 = arith.constant 0 : index
    %c0_2 = arith.constant 0 : index
    %1 = vector.load %arg2[%c0_1, %c0_2] : memref<48x128xbf16, #tpu.memory_space<vmem>>, vector<48x128xbf16>
    %cst = arith.constant dense<0.000000e+00> : vector<128x128xf32>
    %2 = tpu.matmul %0, %1, %cst {dimension_numbers = #tpu.dot_dimension_numbers<[1], [0], [0], [1], [0, 0, 1, 1], [], []>} : vector<128x48xbf16>, vector<48x128xbf16>, vector<128x128xf32> -> vector<128x128xf32>
    %c0_3 = arith.constant 0 : index
    %c0_4 = arith.constant 0 : index
    %3 = vector.load %arg3[%c0_3, %c0_4] : memref<1x128xf32, #tpu.memory_space<vmem>>, vector<1x128xf32>
    %4 = vector.broadcast %3 : vector<1x128xf32> to vector<128x128xf32>
    %5 = arith.addf %2, %4 : vector<128x128xf32>
    %cst_5 = arith.constant 0.000000e+00 : f32
    %6 = vector.broadcast %cst_5 : f32 to vector<128x128xf32>
    %7 = arith.maximumf %5, %6 : vector<128x128xf32>
    %c0_6 = arith.constant 0 : index
    %c0_7 = arith.constant 0 : index
    %8 = vector.load %arg4[%c0_6, %c0_7] : memref<128x128xf32, #tpu.memory_space<vmem>>, vector<128x128xf32>
    tpu.vector_store %arg4[%c0_6, %c0_7], %7 {strides = array<i32>} : memref<128x128xf32, #tpu.memory_space<vmem>>, vector<128x128xf32>,
    return
  }
  func.func @transform_0(%arg0: i32) -> (i32, i32) {
    %c0_i32 = arith.constant 0 : i32
    %c0_i32_0 = arith.constant 0 : i32
    return %arg0, %c0_i32 : i32, i32
  }
  func.func @transform_1(%arg0: i32) -> (i32, i32) {
    %c0_i32 = arith.constant 0 : i32
    %c0_i32_0 = arith.constant 0 : i32
    %c0_i32_1 = arith.constant 0 : i32
    return %c0_i32, %c0_i32_0 : i32, i32
  }
  func.func @transform_2(%arg0: i32) -> (i32, i32) {
    %c0_i32 = arith.constant 0 : i32
    %c0_i32_0 = arith.constant 0 : i32
    %c0_i32_1 = arith.constant 0 : i32
    return %c0_i32, %c0_i32_0 : i32, i32
  }
  func.func @transform_3(%arg0: i32) -> (i32, i32) {
    %c0_i32 = arith.constant 0 : i32
    %c0_i32_0 = arith.constant 0 : i32
    return %arg0, %c0_i32 : i32, i32
  }
}

</mosaic_0001>

<llo_original>
// kernel: tpu_custom_call.1
$region0: #{tpu_custom_call.1}
  #allocation0 [shape = 'u32[]', space=smem, size = 0x4, offset = 0x4, fixed_abs, tag = 'smem constant byte address 0x4 - core index']
  #allocation1 [shape = 'u32[72,128]{1,0:T(1,128)}', space=vmem, size = 0x9000, scoped, tag = 'internal scratch']
  %s0 = inlined_call_operand.vmem [shape: bf16[128,48], index: 0, kind: input, shape index: {}]
  %s1 = inlined_call_operand.vmem [shape: bf16[48,128], index: 1, kind: input, shape index: {}]
  %s2 = inlined_call_operand.vmem [shape: f32[1,128], index: 2, kind: input, shape index: {}]
  %s3 = inlined_call_operand.hbm [shape: f32[128,128], index: 3, kind: output, shape index: {}]
  %s4 = sld [smem:[#allocation0]]
  $region22: #{tpu_custom_call.1} parent=0
    _
  %s6 = ssub.s32 1, %s4
  %s7 = scalar_select 0, %s6, %s4
  $region1: #{tpu_custom_call.1} parent=0
    #allocation2 [shape = 'u8[65536]{0}', space=vmem, size = 0x10000, scoped, tag = 'output window, operand 0, single buffered']
    #allocation3 [shape = 's32[1]{0}', space=sflag, size = 0x4, scoped, tag = 'scoped memory for tpu_custom_call.1']
    %8 = vsyncpa [#allocation3], 0
    // Predicated region
    $region2: #{tpu_custom_call.1} parent=1 // pred_check
      _
    $region3: #{tpu_custom_call.1} parent=1 // pred_check_branch
      %10 = sbr.rel (0) target = $region5
    $region4: #{tpu_custom_call.1} parent=1 // pred_region
      _
    $region5: #{tpu_custom_call.1} parent=1 // pred_fallthru
      _
    // Predicated region
    $region6: #{tpu_custom_call.1} parent=1 // pred_check
      _
    $region7: #{tpu_custom_call.1} parent=1 // pred_check_branch
      %12 = sbr.rel (0) target = $region9
    $region8: #{tpu_custom_call.1} parent=1 // pred_region
      _
    $region9: #{tpu_custom_call.1} parent=1 // pred_fallthru
      _
    // Predicated region
    $region10: #{tpu_custom_call.1} parent=1 // pred_check
      _
    $region11: #{tpu_custom_call.1} parent=1 // pred_check_branch
      %14 = sbr.rel (0) target = $region13
    $region12: #{tpu_custom_call.1} parent=1 // pred_region
      _
    $region13: #{tpu_custom_call.1} parent=1 // pred_fallthru
      _
    %v16 = vld [vmem:[%s0] sm:$0xf]
    %v17 = vld [vmem:[%s0 + $0x4] sm:$0xf]
    %v18 = vld [vmem:[%s0 + $0x8] sm:$0xf]
    %v19 = vld [vmem:[%s0 + $0xc] sm:$0xf]
    %v20 = vld [vmem:[%s0 + $0x10] sm:$0xf]
    %v21 = vld [vmem:[%s0 + $0x14] sm:$0xf]
    %v22 = vld [vmem:[%s0 + $0x18] sm:$0xf]
    %v23 = vld [vmem:[%s0 + $0x1c] sm:$0xf]
    %v24 = vld [vmem:[%s0 + $0x20] sm:$0xf]
    %v25 = vld [vmem:[%s0 + $0x24] sm:$0xf]
    %v26 = vld [vmem:[%s0 + $0x28] sm:$0xf]
    %v27 = vld [vmem:[%s0 + $0x2c] sm:$0xf]
    %v28 = vld [vmem:[%s0 + $0x30] sm:$0xf]
    %v29 = vld [vmem:[%s0 + $0x34] sm:$0xf]
    %v30 = vld [vmem:[%s0 + $0x38] sm:$0xf]
    %v31 = vld [vmem:[%s0 + $0x3c] sm:$0xf]
    %v32 = vld [vmem:[%s1] sm:$0xf]
    %v33 = vld [vmem:[%s1 + $0x4] sm:$0xf]
    %v34 = vld [vmem:[%s1 + $0x8] sm:$0xf]
    %v35 = vld [vmem:[%s1 + $0xc] sm:$0xf]
    %v36 = vld [vmem:[%s1 + $0x10] sm:$0xf]
    %v37 = vld [vmem:[%s1 + $0x14] sm:$0xf]
    %v38 = vld [vmem:[%s2] sm:$0x1]
    %v40 = vperm.slane %v38, 0
    %v58 = vunpack.c.l.b16 %v16
    %v59 = vunpack.c.l.b16 %v17
    %v60 = vunpack.c.l.b16 %v18
    %v61 = vunpack.c.l.b16 %v19
    %v62 = vunpack.c.l.b16 %v20
    %v63 = vunpack.c.l.b16 %v21
    %v64 = vunpack.c.l.b16 %v22
    %v65 = vunpack.c.l.b16 %v23
    %v66 = vunpack.c.l.b16 %v24
    %v67 = vunpack.c.l.b16 %v25
    %v68 = vunpack.c.l.b16 %v26
    %v69 = vunpack.c.l.b16 %v27
    %v70 = vunpack.c.l.b16 %v28
    %v71 = vunpack.c.l.b16 %v29
    %v72 = vunpack.c.l.b16 %v30
    %v73 = vunpack.c.l.b16 %v31
    %v74 = vpack.c.b16 %v59, %v58
    %v75 = vpack.c.b16 %v61, %v60
    %v76 = vpack.c.b16 %v63, %v62
    %v77 = vpack.c.b16 %v65, %v64
    %v78 = vpack.c.b16 %v67, %v66
    %v79 = vpack.c.b16 %v69, %v68
    %v80 = vpack.c.b16 %v71, %v70
    %v81 = vpack.c.b16 %v73, %v72
    %v88 = vunpack.c.l.b16 %v32
    %v89 = vunpack.c.l.b16 %v33
    %v90 = vunpack.c.l.b16 %v34
    %v91 = vunpack.c.l.b16 %v35
    %v92 = vunpack.c.l.b16 %v36
    %v93 = vunpack.c.l.b16 %v37
    %v94 = vpack.c.b16 %v89, %v88
    %v95 = vpack.c.b16 %v91, %v90
    %v96 = vpack.c.b16 %v93, %v92
    %vm100 = vcmask 392192
    %v102 = vsel %vm100, %v74, 0
    %v105 = vsel %vm100, %v75, 0
    %v108 = vsel %vm100, %v76, 0
    %v111 = vsel %vm100, %v77, 0
    %v114 = vsel %vm100, %v78, 0
    %v117 = vsel %vm100, %v79, 0
    %v120 = vsel %vm100, %v80, 0
    %v123 = vsel %vm100, %v81, 0
    %125 = vmatpush.bf16.msra.mxu0 0
    %126 = vmatpush.bf16.msra.mxu0 0
    %127 = vmatpush.bf16.msra.mxu0 0
    %128 = vmatpush.bf16.msra.mxu0 0
    %129 = vmatpush.bf16.msra.mxu0 0
    %130 = vmatpush.bf16.msra.mxu0 %v96
    %131 = vmatpush.bf16.msra.mxu0 %v95
    %132 = vmatpush.bf16.msra.mxu0 %v94
    %133 = vmatmul.bf16.gmra.mxu0 %v102
    %v134 = vpop.f32.mrf.mxu0
    %v135 = vadd.f32 %v40, %v134
    %v136 = vpop.f32.mrf.mxu0
    %v137 = vadd.f32 %v40, %v136
    %138 = vmatmul.bf16.gmra.mxu0 %v105
    %v139 = vpop.f32.mrf.mxu0
    %v140 = vadd.f32 %v40, %v139
    %v141 = vpop.f32.mrf.mxu0
    %v142 = vadd.f32 %v40, %v141
    %143 = vmatmul.bf16.gmra.mxu0 %v108
    %v144 = vpop.f32.mrf.mxu0
    %v145 = vadd.f32 %v40, %v144
    %v146 = vpop.f32.mrf.mxu0
    %v147 = vadd.f32 %v40, %v146
    %148 = vmatmul.bf16.gmra.mxu0 %v111
    %v149 = vpop.f32.mrf.mxu0
    %v150 = vadd.f32 %v40, %v149
    %v151 = vpop.f32.mrf.mxu0
    %v152 = vadd.f32 %v40, %v151
    %153 = vmatmul.bf16.gmra.mxu0 %v114
    %v154 = vpop.f32.mrf.mxu0
    %v155 = vadd.f32 %v40, %v154
    %v156 = vpop.f32.mrf.mxu0
    %v157 = vadd.f32 %v40, %v156
    %158 = vmatmul.bf16.gmra.mxu0 %v117
    %v159 = vpop.f32.mrf.mxu0
    %v160 = vadd.f32 %v40, %v159
    %v161 = vpop.f32.mrf.mxu0
    %v162 = vadd.f32 %v40, %v161
    %163 = vmatmul.bf16.gmra.mxu0 %v120
    %v164 = vpop.f32.mrf.mxu0
    %v165 = vadd.f32 %v40, %v164
    %v166 = vpop.f32.mrf.mxu0
    %v167 = vadd.f32 %v40, %v166
    %168 = vmatmul.bf16.gmra.mxu0 %v123
    %v169 = vpop.f32.mrf.mxu0
    %v170 = vadd.f32 %v40, %v169
    %v171 = vpop.f32.mrf.mxu0
    %v172 = vadd.f32 %v40, %v171
    %173 = vdwg.mxu0
    %v174 = vmax.f32 %v135, 0.0
    %v175 = vmax.f32 %v137, 0.0
    %v176 = vmax.f32 %v140, 0.0
    %v177 = vmax.f32 %v142, 0.0
    %v178 = vmax.f32 %v145, 0.0
    %v179 = vmax.f32 %v147, 0.0
    %v180 = vmax.f32 %v150, 0.0
    %v181 = vmax.f32 %v152, 0.0
    %v182 = vmax.f32 %v155, 0.0
    %v183 = vmax.f32 %v157, 0.0
    %v184 = vmax.f32 %v160, 0.0
    %v185 = vmax.f32 %v162, 0.0
    %v186 = vmax.f32 %v165, 0.0
    %v187 = vmax.f32 %v167, 0.0
    %v188 = vmax.f32 %v170, 0.0
    %v189 = vmax.f32 %v172, 0.0
    %190 = vst [vmem:[#allocation2] sm:$0xff] %v174
    %191 = vst [vmem:[#allocation2 + $0x8] sm:$0xff] %v175
    %192 = vst [vmem:[#allocation2 + $0x10] sm:$0xff] %v176
    %193 = vst [vmem:[#allocation2 + $0x18] sm:$0xff] %v177
    %194 = vst [vmem:[#allocation2 + $0x20] sm:$0xff] %v178
    %195 = vst [vmem:[#allocation2 + $0x28] sm:$0xff] %v179
    %196 = vst [vmem:[#allocation2 + $0x30] sm:$0xff] %v180
    %197 = vst [vmem:[#allocation2 + $0x38] sm:$0xff] %v181
    %198 = vst [vmem:[#allocation2 + $0x40] sm:$0xff] %v182
    %199 = vst [vmem:[#allocation2 + $0x48] sm:$0xff] %v183
    %200 = vst [vmem:[#allocation2 + $0x50] sm:$0xff] %v184
    %201 = vst [vmem:[#allocation2 + $0x58] sm:$0xff] %v185
    %202 = vst [vmem:[#allocation2 + $0x60] sm:$0xff] %v186
    %203 = vst [vmem:[#allocation2 + $0x68] sm:$0xff] %v187
    %204 = vst [vmem:[#allocation2 + $0x70] sm:$0xff] %v188
    %205 = vst [vmem:[#allocation2 + $0x78] sm:$0xff] %v189
    // Predicated region
    $region14: #{tpu_custom_call.1} parent=1 // pred_check
      _
    $region15: #{tpu_custom_call.1} parent=1 // pred_check_branch
      %207 = sbr.rel (0) target = $region17
    $region16: #{tpu_custom_call.1} parent=1 // pred_region
      %209 = vsyncadd [#allocation3], 0
      %s210 = sshll.u32 [#allocation2], 4
      %s211 = int_to_ptr.vmem [resolvable:$true] %s210
      %s212 = sshll.u32 %s3, 4
      %s213 = int_to_ptr.hbm [resolvable:$true] %s212
      %218 = dma.vmem_to_hbm [thread:$0]  %s211, 2048, %s213, [#allocation3], 128, 128, 8
    $region17: #{tpu_custom_call.1} parent=1 // pred_fallthru
      _
    // Predicated region
    $region18: #{tpu_custom_call.1} parent=1 // pred_check
      _
    $region19: #{tpu_custom_call.1} parent=1 // pred_check_branch
      %220 = sbr.rel (0) target = $region21
    $region20: #{tpu_custom_call.1} parent=1 // pred_region
      %222 = dma.done [#allocation3], 2048
    $region21: #{tpu_custom_call.1} parent=1 // pred_fallthru
      _
    %223 = vsyncpa [#allocation3], 1

</llo_original>
